<compile_context>
chip_gen: v5e
topology: v5e:2x2
jax: 0.10.0
libtpu: 0.0.40
codegen_flags: <defaults>
</compile_context>

<pallas_src>
import functools

import jax
import jax.numpy as jnp
from jax.experimental import pallas as pl
from jax.experimental.pallas import tpu as pltpu

_OUT_SUBLANES = 8      # per-core output block is (8, 128): tile-aligned
_OUT_LANES = 128


def _round_up(x: int, m: int) -> int:
    return ((x + m - 1) // m) * m


def _cdiv(a: int, b: int) -> int:
    return (a + b - 1) // b


def _chip_config():
    """Returns (num_cores, pred_block_budget_bytes, vmem_limit_cap_bytes).

    Conservative defaults run on every generation; when the hardware query
    succeeds we use larger streaming blocks on 128-MiB-VMEM chips (v5e/v6e,
    1 TensorCore) and shard the batch across 2 TensorCores with a <=48 MiB
    scoped-VMEM cap on 64-MiB-VMEM (v7x-class) chips.
    """
    num_cores = 1
    budget = 8 * 1024 * 1024
    cap = 32 * 1024 * 1024
    try:
        info = pltpu.get_tpu_info()
        vmem = getattr(info, "vmem_capacity_bytes", None)
        if vmem is not None:
            if vmem >= 100 * 1024 * 1024:        # v5e / v6e: 128 MiB VMEM, 1 TC
                budget = 16 * 1024 * 1024
                cap = 96 * 1024 * 1024
            elif vmem <= 64 * 1024 * 1024:       # v7x-class: 64 MiB VMEM, 2 TCs
                num_cores = 2
                budget = 8 * 1024 * 1024
                cap = 48 * 1024 * 1024
    except Exception:
        pass                                     # keep conservative defaults
    return num_cores, budget, cap


def _accuracy_kernel(pred_ref, tgt_ref, out_ref, *, topk: int,
                     batch_size: int, tile_b: int):
    core = pl.program_id(0)          # parallel axis (TensorCore shard)
    step = pl.program_id(1)          # arbitrary axis (batch accumulation)
    steps = pl.num_programs(1)

    @pl.when(step == 0)
    def _():
        out_ref[...] = jnp.zeros_like(out_ref)

    pred = pred_ref[...]             # NATIVE dtype (TB, C): no full-tile upcast
    tgt = tgt_ref[...]               # (TB, 1) int32
    tb, c = pred.shape

    col = jax.lax.broadcasted_iota(jnp.int32, (tb, c), 1)
    is_tgt_col = col == tgt          # one-hot target column

    # Prediction value at the target index (exact masked-sum gather: x + 0 == x
    # exactly in any float dtype, so this is safe in bf16).
    zero = jnp.zeros((), dtype=pred.dtype)
    tgt_val = jnp.sum(jnp.where(is_tgt_col, pred, zero), axis=1, keepdims=True)

    # Rank with stable first-occurrence tie-breaking (same as jax.lax.top_k).
    # Compares in native dtype, accumulation in int32.
    indicator = (pred > tgt_val) | ((pred == tgt_val) & (col < tgt))
    rank = jnp.sum(indicator.astype(jnp.int32), axis=1, keepdims=True)  # (TB,1)

    # Mask (a) rows past the true batch size (ragged last block / clamped
    # out-of-range blocks) and (b) out-of-range targets (never correct).
    row0 = (core * steps + step) * tile_b
    rows = jax.lax.broadcasted_iota(jnp.int32, (tb, 1), 0) + row0
    valid = (rows < batch_size) & (tgt >= 0) & (tgt < c)

    hit = jnp.where(valid & (rank < topk), jnp.int32(1), jnp.int32(0))
    out_ref[...] += jnp.sum(hit)     # scalar count broadcast into (8,128) block


def accuracy(prediction: jax.Array, target: jax.Array, topk: int = 1,
             tile_b: int | None = None) -> jax.Array:
    """prediction: (B, C) float (any dtype); target: (B,) int. Returns scalar f32."""
    b, c = prediction.shape
    itemsize = jnp.dtype(prediction.dtype).itemsize
    tgt_2d = target.astype(jnp.int32).reshape(b, 1)

    num_cores, budget, vmem_cap = _chip_config()

    # Batch tile sized by bytes (~budget of prediction per block) so the fixed
    # ~0.35 us per-grid-step overhead is amortized; rounded to the sublane rule.
    if tile_b is None:
        tile_b = budget // max(1, c * itemsize)
    tile_b = max(8, min(int(tile_b), 8192, _round_up(b, 8)))
    tile_b = _round_up(tile_b, 8)
    # TODO(synk): for huge class counts (C*itemsize*8 approaching VMEM, e.g. LLM
    # vocabs) add a class-dimension grid axis with per-C-tile partial ranks.

    # No wrapper-side padding: ragged grid + in-kernel row masking.
    num_blocks = _cdiv(b, tile_b)
    steps = _cdiv(num_blocks, num_cores)
    last_block = num_blocks - 1

    def blk_map(cc, i):
        # Clamp so a core whose logical block is past the end re-reads the last
        # block; the kernel masks those rows out via the global row index.
        return (jnp.minimum(cc * steps + i, last_block), 0)

    block_bytes = tile_b * c * itemsize + tile_b * _OUT_LANES * 4
    vmem_limit = int(min(vmem_cap, max(32 * 1024 * 1024, 8 * block_bytes)))

    out = pl.pallas_call(
        functools.partial(_accuracy_kernel, topk=topk, batch_size=b,
                          tile_b=tile_b),
        out_shape=jax.ShapeDtypeStruct((num_cores * _OUT_SUBLANES, _OUT_LANES),
                                       jnp.int32),
        grid=(num_cores, steps),
        in_specs=[
            pl.BlockSpec((tile_b, c), blk_map),
            pl.BlockSpec((tile_b, 1), blk_map),
        ],
        # Each core owns one (8,128) int32 count block, resident across steps.
        out_specs=pl.BlockSpec((_OUT_SUBLANES, _OUT_LANES), lambda cc, i: (cc, 0)),
        compiler_params=pltpu.CompilerParams(
            dimension_semantics=("parallel", "arbitrary"),
            vmem_limit_bytes=vmem_limit),
    )(prediction, tgt_2d)

    # One element per core block holds that core's count; sum and scale once.
    total = jnp.sum(out[0::_OUT_SUBLANES, 0]).astype(jnp.float32)
    return total * jnp.float32(100.0 / b)


def _reference_accuracy(prediction: jax.Array, target: jax.Array, k: int) -> jax.Array:
    """Pure-JAX reference: membership of target in lax.top_k indices."""
    _, idx = jax.lax.top_k(prediction.astype(jnp.float32), k)
    correct = jnp.any(idx == target[:, None], axis=1).astype(jnp.float32)
    return jnp.sum(correct) * (100.0 / prediction.shape[0])


if __name__ == "__main__":
    key = jax.random.PRNGKey(0)
    k_pred, k_tgt = jax.random.split(key)

    # Non-multiple batch exercises the ragged (un-padded) last block path.
    B, C = 37, 128
    prediction = jax.random.normal(k_pred, (B, C), dtype=jnp.float32)
    target = jax.random.randint(k_tgt, (B,), 0, C, dtype=jnp.int32)

    # Multi-block accumulation path (tile_b=8 -> several grid steps).
    for k in (1, 5):
        acc = accuracy(prediction, target, topk=k, tile_b=8)
        jax.block_until_ready(acc)
        ref = _reference_accuracy(prediction, target, k)
        assert abs(float(acc) - float(ref)) < 1e-3, (k, float(acc), float(ref))

    # Default tile-size path.
    acc_def = accuracy(prediction, target, topk=1)
    jax.block_until_ready(acc_def)
    ref_def = _reference_accuracy(prediction, target, 1)
    assert abs(float(acc_def) - float(ref_def)) < 1e-3, (float(acc_def), float(ref_def))

    # Native bf16 input: compares run in bf16, only counts are widened.
    pred_bf16 = prediction.astype(jnp.bfloat16)
    acc_bf = accuracy(pred_bf16, target, topk=5)
    jax.block_until_ready(acc_bf)
    ref_bf = _reference_accuracy(pred_bf16.astype(jnp.float32), target, 5)
    assert abs(float(acc_bf) - float(ref_bf)) < 1e-3, (float(acc_bf), float(ref_bf))

    print("KERNEL_OK")
</pallas_src>

<mosaic_0001>
module attributes {stable_mosaic.version = 11 : i64} {
  func.func @_accuracy_kernel(%arg0: i32, %arg1: i32, %arg2: memref<8x128xf32, #tpu.memory_space<vmem>>, %arg3: memref<8x1xi32, #tpu.memory_space<vmem>>, %arg4: memref<8x128xi32, #tpu.memory_space<vmem>>) attributes {dimension_semantics = [#tpu.dimension_semantics<parallel>, #tpu.dimension_semantics<arbitrary>], iteration_bounds = array<i64: 1, 5>, scalar_prefetch = 0 : i64, scratch_operands = 0 : i64, tpu.core_type = #tpu.core_type<tc>, window_params = [{transform_indices = @transform_0, window_bounds = array<i64: 8, 128>}, {transform_indices = @transform_1, window_bounds = array<i64: 8, 1>}, {transform_indices = @transform_2, window_bounds = array<i64: 8, 128>}]} {
    %c0_i32 = arith.constant 0 : i32
    %0 = arith.cmpi eq, %arg1, %c0_i32 : i32
    %1 = arith.extui %0 : i1 to i32
    %c0_i32_0 = arith.constant 0 : i32
    %2 = arith.cmpi ne, %1, %c0_i32_0 : i32
    scf.if %2 {
      %c0_i32_14 = arith.constant 0 : i32
      %51 = vector.broadcast %c0_i32_14 : i32 to vector<8x128xi32>
      %c0_15 = arith.constant 0 : index
      %c0_16 = arith.constant 0 : index
      %52 = vector.load %arg4[%c0_15, %c0_16] : memref<8x128xi32, #tpu.memory_space<vmem>>, vector<8x128xi32>
      tpu.vector_store %arg4[%c0_15, %c0_16], %51 {strides = array<i32>} : memref<8x128xi32, #tpu.memory_space<vmem>>, vector<8x128xi32>,
    } else {
    }
    %c0 = arith.constant 0 : index
    %c0_1 = arith.constant 0 : index
    %3 = vector.load %arg2[%c0, %c0_1] : memref<8x128xf32, #tpu.memory_space<vmem>>, vector<8x128xf32>
    %c0_2 = arith.constant 0 : index
    %c0_3 = arith.constant 0 : index
    %4 = vector.load %arg3[%c0_2, %c0_3] : memref<8x1xi32, #tpu.memory_space<vmem>>, vector<8x1xi32>
    %5 = tpu.iota {dimensions = array<i32: 1>} : vector<8x128xi32>
    %6 = vector.broadcast %4 : vector<8x1xi32> to vector<8x128xi32>
    %7 = arith.cmpi eq, %5, %6 : vector<8x128xi32>
    %cst = arith.constant 0.000000e+00 : f32
    %8 = vector.broadcast %cst : f32 to vector<8x128xf32>
    %9 = arith.select %7, %3, %8 : vector<8x128xi1>, vector<8x128xf32>
    %cst_4 = arith.constant dense<0.000000e+00> : vector<8xf32>
    %10 = vector.multi_reduction <add>, %9, %cst_4 [1] : vector<8x128xf32> to vector<8xf32>
    %11 = vector.shape_cast %10 : vector<8xf32> to vector<8x1xf32>
    %12 = vector.broadcast %11 : vector<8x1xf32> to vector<8x128xf32>
    %13 = arith.cmpf ogt, %3, %12 : vector<8x128xf32>
    %14 = vector.broadcast %11 : vector<8x1xf32> to vector<8x128xf32>
    %15 = arith.cmpf oeq, %3, %14 : vector<8x128xf32>
    %16 = vector.broadcast %4 : vector<8x1xi32> to vector<8x128xi32>
    %17 = arith.cmpi slt, %5, %16 : vector<8x128xi32>
    %18 = arith.andi %15, %17 : vector<8x128xi1>
    %19 = arith.ori %13, %18 : vector<8x128xi1>
    %20 = arith.extui %19 : vector<8x128xi1> to vector<8x128xi32>
    %cst_5 = arith.constant dense<0> : vector<8xi32>
    %21 = vector.multi_reduction <add>, %20, %cst_5 [1] : vector<8x128xi32> to vector<8xi32>
    %22 = vector.shape_cast %21 : vector<8xi32> to vector<8x1xi32>
    %c5_i32 = arith.constant 5 : i32
    %23 = arith.muli %arg0, %c5_i32 : i32
    %24 = arith.addi %23, %arg1 : i32
    %c8_i32 = arith.constant 8 : i32
    %25 = arith.muli %24, %c8_i32 : i32
    %26 = tpu.iota {dimensions = array<i32: 0>} : vector<8x1xi32>
    %27 = vector.broadcast %25 : i32 to vector<8x1xi32>
    %28 = arith.addi %26, %27 : vector<8x1xi32>
    %c37_i32 = arith.constant 37 : i32
    %29 = vector.broadcast %c37_i32 : i32 to vector<8x1xi32>
    %30 = arith.cmpi slt, %28, %29 : vector<8x1xi32>
    %c0_i32_6 = arith.constant 0 : i32
    %31 = vector.broadcast %c0_i32_6 : i32 to vector<8x1xi32>
    %32 = arith.cmpi sge, %4, %31 : vector<8x1xi32>
    %33 = arith.andi %30, %32 : vector<8x1xi1>
    %c128_i32 = arith.constant 128 : i32
    %34 = vector.broadcast %c128_i32 : i32 to vector<8x1xi32>
    %35 = arith.cmpi slt, %4, %34 : vector<8x1xi32>
    %36 = arith.andi %33, %35 : vector<8x1xi1>
    %c1_i32 = arith.constant 1 : i32
    %37 = vector.broadcast %c1_i32 : i32 to vector<8x1xi32>
    %38 = arith.cmpi slt, %22, %37 : vector<8x1xi32>
    %39 = arith.andi %36, %38 : vector<8x1xi1>
    %c1_i32_7 = arith.constant 1 : i32
    %c0_i32_8 = arith.constant 0 : i32
    %40 = vector.broadcast %c1_i32_7 : i32 to vector<8x1xi32>
    %41 = vector.broadcast %c0_i32_8 : i32 to vector<8x1xi32>
    %42 = arith.select %39, %40, %41 : vector<8x1xi1>, vector<8x1xi32>
    %c0_9 = arith.constant 0 : index
    %c0_10 = arith.constant 0 : index
    %43 = vector.load %arg4[%c0_9, %c0_10] : memref<8x128xi32, #tpu.memory_space<vmem>>, vector<8x128xi32>
    %44 = vector.shape_cast %42 : vector<8x1xi32> to vector<1x8x1xi32>
    %cst_11 = arith.constant dense<0> : vector<1xi32>
    %45 = vector.multi_reduction <add>, %44, %cst_11 [1, 2] : vector<1x8x1xi32> to vector<1xi32>
    %46 = vector.shape_cast %45 : vector<1xi32> to vector<1x1x1xi32>
    %47 = vector.extract %46[0, 0, 0] : i32 from vector<1x1x1xi32>
    %48 = vector.broadcast %47 : i32 to vector<8x128xi32>
    %49 = arith.addi %43, %48 : vector<8x128xi32>
    %c0_12 = arith.constant 0 : index
    %c0_13 = arith.constant 0 : index
    %50 = vector.load %arg4[%c0_12, %c0_13] : memref<8x128xi32, #tpu.memory_space<vmem>>, vector<8x128xi32>
    tpu.vector_store %arg4[%c0_12, %c0_13], %49 {strides = array<i32>} : memref<8x128xi32, #tpu.memory_space<vmem>>, vector<8x128xi32>,
    return
  }
  func.func @transform_0(%arg0: i32, %arg1: i32) -> (i32, i32) {
    %c5_i32 = arith.constant 5 : i32
    %0 = arith.muli %arg0, %c5_i32 : i32
    %1 = arith.addi %0, %arg1 : i32
    %c4_i32 = arith.constant 4 : i32
    %2 = arith.minsi %1, %c4_i32 : i32
    %c0_i32 = arith.constant 0 : i32
    %c0_i32_0 = arith.constant 0 : i32
    return %2, %c0_i32 : i32, i32
  }
  func.func @transform_1(%arg0: i32, %arg1: i32) -> (i32, i32) {
    %c5_i32 = arith.constant 5 : i32
    %0 = arith.muli %arg0, %c5_i32 : i32
    %1 = arith.addi %0, %arg1 : i32
    %c4_i32 = arith.constant 4 : i32
    %2 = arith.minsi %1, %c4_i32 : i32
    %c0_i32 = arith.constant 0 : i32
    %c0_i32_0 = arith.constant 0 : i32
    return %2, %c0_i32 : i32, i32
  }
  func.func @transform_2(%arg0: i32, %arg1: i32) -> (i32, i32) {
    %c0_i32 = arith.constant 0 : i32
    %c0_i32_0 = arith.constant 0 : i32
    return %arg0, %c0_i32 : i32, i32
  }
}

</mosaic_0001>

<llo_original>
// kernel: tpu_custom_call.1
$region0: #{tpu_custom_call.1}
  #allocation0 [shape = 'u32[]', space=smem, size = 0x4, offset = 0x4, fixed_abs, tag = 'smem constant byte address 0x4 - core index']
  #allocation1 [shape = 'u32[72,128]{1,0:T(1,128)}', space=vmem, size = 0x9000, scoped, tag = 'internal scratch']
  %s0 = inlined_call_operand.vmem [shape: f32[37,128], index: 0, kind: input, shape index: {}]
  %s1 = inlined_call_operand.vmem [shape: s32[37,1], index: 1, kind: input, shape index: {}]
  %s2 = inlined_call_operand.hbm [shape: s32[8,128], index: 2, kind: output, shape index: {}]
  %s3 = sld [smem:[#allocation0]]
  $region45: #{tpu_custom_call.1} parent=0
    _
  %s5 = ssub.s32 1, %s3
  %s6 = scalar_select 0, %s5, %s3
  $region1: #{tpu_custom_call.1} parent=0
    #allocation2 [shape = 'u8[4096]{0}', space=vmem, size = 0x1000, scoped, tag = 'output window, operand 0, single buffered']
    #allocation3 [shape = 's32[2]{0}', space=sflag, size = 0x8, scoped, tag = 'scoped memory for tpu_custom_call.1']
    %7 = vsyncpa [#allocation3], 0
    loop: start=0, step=1, limit=7
    $region2: #{tpu_custom_call.1} parent=1 // loop_pre_header
      _
    $region3: #{tpu_custom_call.1} parent=1 // loop_header
      %s9 = sphi 0, %s13
      %p10 = scmp.ge.s32.totalorder %s9, 7
      %s16 = sphi 0, %s28
      %s17 = sphi 0, %s24
      %s18 = sphi 0, %s16
      %s19 = sphi 0, %s17
      %s20 = sphi 0, %s18
      %s21 = sphi 0, %s19
      %s39 = sphi 0, %s41
      %s42 = sphi 0, %s39
      %s43 = sphi 0, %s42
      %s59 = sphi 0, %s43
      %s73 = sphi 0, %s75
      %s76 = sphi 0, %s73
      %s77 = sphi 0, %s76
      %s93 = sphi 0, %s77
      %s99 = sphi 0, %s101
      %s102 = sphi 0, %s99
      %s103 = sphi 0, %s102
      %s119 = sphi 0, %s103
    $region4: #{tpu_custom_call.1} parent=1 // loop_header_branch
      %12 = sbr.rel (%p10) target = $region8
    $region5: #{tpu_custom_call.1} parent=1 // loop_body
      %s14 = ssub.s32 %s9, 1
      %s15 = ssub.s32 %s9, 2
      %s22 = sadd.s32 1, %s17
      %p23 = scmp.ge.s32.totalorder %s22, 5
      %s24 = scalar_select %p23, 0, %s22
      %s25 = sadd.s32 1, %s16
      %s26 = scalar_select %p23, %s25, %s16
      %p27 = scmp.ge.s32.totalorder %s26, 1
      %s28 = scalar_select %p27, 0, %s26
      %s29 = smul.u32 %s16, 5
      %s30 = sadd.s32 %s29, %s17
      %p31 = scmp.lt.s32.totalorder %s30, 4
      %s32 = scalar_select %p31, %s30, 4
      %s33 = smul.u32 %s28, 5
      %s34 = sadd.s32 %s33, %s24
      %p35 = scmp.lt.s32.totalorder %s34, 4
      %s36 = scalar_select %p35, %s34, 4
      %s37 = ssub.s32 %s32, %s36
      %p38 = scmp.eq.s32.totalorder %s37, 0
      %s40 = sadd.s32 %s39, 1
      %s41 = scalar_select %p38, %s39, %s40
      %p44 = pneg %p38
      %p45 = scmp.eq.s32.totalorder %s9, 4
      %p46 = por %p44, %p45
      %p47 = scmp.ne.s32.totalorder %s39, %s42
      %p48 = scmp.eq.s32.totalorder %s9, 0
      %p49 = por %p47, %p48
      %p50 = scmp.ne.s32.totalorder %s39, %s42
      %p51 = scmp.eq.s32.totalorder %s14, 4
      %p52 = por %p50, %p51
      %p53 = scmp.ne.s32.totalorder %s42, %s43
      %p54 = scmp.eq.s32.totalorder %s14, 0
      %p55 = por %p53, %p54
      %p56 = scmp.ne.s32.totalorder %s42, %s43
      %p57 = scmp.eq.s32.totalorder %s15, 4
      %p58 = por %p56, %p57
      %p60 = scmp.ne.s32.totalorder %s43, %s59
      %p61 = scmp.eq.s32.totalorder %s15, 0
      %p62 = por %p60, %p61
      %s63 = smul.u32 %s16, 5
      %s64 = sadd.s32 %s63, %s17
      %p65 = scmp.lt.s32.totalorder %s64, 4
      %s66 = scalar_select %p65, %s64, 4
      %s67 = smul.u32 %s28, 5
      %s68 = sadd.s32 %s67, %s24
      %p69 = scmp.lt.s32.totalorder %s68, 4
      %s70 = scalar_select %p69, %s68, 4
      %s71 = ssub.s32 %s66, %s70
      %p72 = scmp.eq.s32.totalorder %s71, 0
      %s74 = sadd.s32 %s73, 1
      %s75 = scalar_select %p72, %s73, %s74
      %p78 = pneg %p72
      %p79 = scmp.eq.s32.totalorder %s9, 4
      %p80 = por %p78, %p79
      %p81 = scmp.ne.s32.totalorder %s73, %s76
      %p82 = scmp.eq.s32.totalorder %s9, 0
      %p83 = por %p81, %p82
      %p84 = scmp.ne.s32.totalorder %s73, %s76
      %p85 = scmp.eq.s32.totalorder %s14, 4
      %p86 = por %p84, %p85
      %p87 = scmp.ne.s32.totalorder %s76, %s77
      %p88 = scmp.eq.s32.totalorder %s14, 0
      %p89 = por %p87, %p88
      %p90 = scmp.ne.s32.totalorder %s76, %s77
      %p91 = scmp.eq.s32.totalorder %s15, 4
      %p92 = por %p90, %p91
      %p94 = scmp.ne.s32.totalorder %s77, %s93
      %p95 = scmp.eq.s32.totalorder %s15, 0
      %p96 = por %p94, %p95
      %s97 = ssub.s32 %s16, %s28
      %p98 = scmp.eq.s32.totalorder %s97, 0
      %s100 = sadd.s32 %s99, 1
      %s101 = scalar_select %p98, %s99, %s100
      %p104 = pneg %p98
      %p105 = scmp.eq.s32.totalorder %s9, 4
      %p106 = por %p104, %p105
      %p107 = scmp.ne.s32.totalorder %s99, %s102
      %p108 = scmp.eq.s32.totalorder %s9, 0
      %p109 = por %p107, %p108
      %p110 = scmp.ne.s32.totalorder %s99, %s102
      %p111 = scmp.eq.s32.totalorder %s14, 4
      %p112 = por %p110, %p111
      %p113 = scmp.ne.s32.totalorder %s102, %s103
      %p114 = scmp.eq.s32.totalorder %s14, 0
      %p115 = por %p113, %p114
      %p116 = scmp.ne.s32.totalorder %s102, %s103
      %p117 = scmp.eq.s32.totalorder %s15, 4
      %p118 = por %p116, %p117
      %p120 = scmp.ne.s32.totalorder %s103, %s119
      %p121 = scmp.eq.s32.totalorder %s15, 0
      %p122 = por %p120, %p121
      %p123 = scmp.le.s32.totalorder 1, %s9
      %p124 = scmp.lt.s32.totalorder %s9, 6
      %p125 = pnand %p123, %p124
      %p126 = pneg %p125
      // Predicated region
      $region9: #{tpu_custom_call.1} parent=5 // pred_check
        _
      $region10: #{tpu_custom_call.1} parent=5 // pred_check_branch
        %128 = sbr.rel (%p125) target = $region12
      $region11: #{tpu_custom_call.1} parent=5 // pred_region
        %s129 = ssub.s32 %s9, 1
      $region12: #{tpu_custom_call.1} parent=5 // pred_fallthru
        _
      %p130 = scmp.lt.s32.totalorder %s9, 5
      // Predicated region
      $region13: #{tpu_custom_call.1} parent=5 // pred_check
        %p131 = pneg %p130
      $region14: #{tpu_custom_call.1} parent=5 // pred_check_branch
        %133 = sbr.rel (%p131) target = $region16
      $region15: #{tpu_custom_call.1} parent=5 // pred_region
        // Predicated region
        $region17: #{tpu_custom_call.1} parent=15 // pred_check
          %p134 = pneg %p49
        $region18: #{tpu_custom_call.1} parent=15 // pred_check_branch
          %136 = sbr.rel (%p134) target = $region20
        $region19: #{tpu_custom_call.1} parent=15 // pred_region
          %s137 = smul.u32 %s16, 5
          %s138 = sadd.s32 %s137, %s17
          %p139 = scmp.lt.s32.totalorder %s138, 4
          %s140 = scalar_select %p139, %s138, 4
          %p141 = scmp.lt.s32.totalorder %s140, 4
          %s142 = scalar_select %p141, %s140, 4
          %s143 = smul.addr %s142, 8
          %s144 = scalar_lea.vmem %s0, %s143
          %s145 = smul.u32 %s16, 5
          %s146 = sadd.s32 %s145, %s17
          %p147 = scmp.lt.s32.totalorder %s146, 4
          %s148 = scalar_select %p147, %s146, 4
        $region20: #{tpu_custom_call.1} parent=15 // pred_fallthru
          _
        // Predicated region
        $region21: #{tpu_custom_call.1} parent=15 // pred_check
          %p149 = pneg %p83
        $region22: #{tpu_custom_call.1} parent=15 // pred_check_branch
          %151 = sbr.rel (%p149) target = $region24
        $region23: #{tpu_custom_call.1} parent=15 // pred_region
          %s152 = smul.u32 %s16, 5
          %s153 = sadd.s32 %s152, %s17
          %p154 = scmp.lt.s32.totalorder %s153, 4
          %s155 = scalar_select %p154, %s153, 4
          %p156 = scmp.lt.s32.totalorder %s155, 4
          %s157 = scalar_select %p156, %s155, 4
          %s158 = smul.addr %s157, 8
          %s159 = scalar_lea.vmem %s1, %s158
          %s160 = smul.u32 %s16, 5
          %s161 = sadd.s32 %s160, %s17
          %p162 = scmp.lt.s32.totalorder %s161, 4
          %s163 = scalar_select %p162, %s161, 4
        $region24: #{tpu_custom_call.1} parent=15 // pred_fallthru
          _
      $region16: #{tpu_custom_call.1} parent=5 // pred_fallthru
        _
      %p164 = scmp.le.s32.totalorder 1, %s9
      %p165 = scmp.lt.s32.totalorder %s9, 6
      %p166 = pnand %p164, %p165
      %p167 = pneg %p166
      // Predicated region
      $region25: #{tpu_custom_call.1} parent=5 // pred_check
        _
      $region26: #{tpu_custom_call.1} parent=5 // pred_check_branch
        %169 = sbr.rel (%p166) target = $region28
      $region27: #{tpu_custom_call.1} parent=5 // pred_region
        %s170 = ssub.s32 %s9, 1
        %s171 = smul.u32 %s18, 5
        %s172 = sadd.s32 %s171, %s19
        %p173 = scmp.lt.s32.totalorder %s172, 4
        %s174 = scalar_select %p173, %s172, 4
        %p175 = scmp.lt.s32.totalorder %s174, 4
        %s176 = scalar_select %p175, %s174, 4
        %s177 = smul.addr %s176, 8
        %s178 = scalar_lea.vmem %s0, %s177
        %p179 = pneg %p55
        %p180 = pneg %p52
        %s181 = smul.u32 %s18, 5
        %s182 = sadd.s32 %s181, %s19
        %p183 = scmp.lt.s32.totalorder %s182, 4
        %s184 = scalar_select %p183, %s182, 4
        %p185 = scmp.lt.s32.totalorder %s184, 4
        %s186 = scalar_select %p185, %s184, 4
        %s187 = smul.addr %s186, 8
        %s188 = scalar_lea.vmem %s1, %s187
        %p189 = pneg %p89
        %p190 = pneg %p86
        %p191 = pneg %p115
        %p192 = pneg %p112
        %s193 = smul.u32 %s18, 5
        %s194 = sadd.s32 %s193, %s19
        %p195 = scmp.lt.s32.totalorder %s194, 4
        %s196 = scalar_select %p195, %s194, 4
        %p197 = scmp.lt.s32.totalorder %s196, 4
        %s198 = scalar_select %p197, %s196, 4
        %s199 = smul.addr %s198, 8
        %s200 = scalar_lea.vmem %s0, %s199
        %s201 = smul.u32 %s18, 5
        %s202 = sadd.s32 %s201, %s19
        %p203 = scmp.lt.s32.totalorder %s202, 4
        %s204 = scalar_select %p203, %s202, 4
        %s205 = smul.u32 %s18, 5
        %s206 = sadd.s32 %s205, %s19
        %p207 = scmp.lt.s32.totalorder %s206, 4
        %s208 = scalar_select %p207, %s206, 4
        %p209 = scmp.lt.s32.totalorder %s208, 4
        %s210 = scalar_select %p209, %s208, 4
        %s211 = smul.addr %s210, 8
        %s212 = scalar_lea.vmem %s1, %s211
        %s213 = smul.u32 %s18, 5
        %s214 = sadd.s32 %s213, %s19
        %p215 = scmp.lt.s32.totalorder %s214, 4
        %s216 = scalar_select %p215, %s214, 4
        %p217 = scmp.eq.s32.totalorder %s19, 0
        // Predicated region
        $region29: #{tpu_custom_call.1} parent=27 // pred_check
          %p218 = pneg %p217
        $region30: #{tpu_custom_call.1} parent=27 // pred_check_branch
          %220 = sbr.rel (%p218) target = $region32
        $region31: #{tpu_custom_call.1} parent=27 // pred_region
          %221 = vst [vmem:[#allocation2] sm:$0xff] 0
        $region32: #{tpu_custom_call.1} parent=27 // pred_fallthru
          _
        %v222 = vld [vmem:[%s200] sm:$0xff]
        %v223 = vld [vmem:[%s212] sm:$0xff]
        %v224 = vlaneseq
        %v225 = vand.u32 %v224, 127
        %226 = vset.pattern.permute.xlu0 0
        %227 = vperm.xlu0 %226, %v223
        %v228 = vpop.permute.xlu0 %227
        %vm229 = vcmp.eq.s32.totalorder %v225, %v228
        %v230 = vsel %vm229, %v222, 0.0
        %231 = vadd.xlane.f32.xlu0 %v230
        %v232 = vpop.xlane.xlu0 %231
        %vm233 = vcmp.gt.f32.partialorder %v222, %v232
        %vm234 = vcmp.eq.f32.partialorder %v222, %v232
        %vm235 = vcmp.lt.s32.totalorder %v225, %v228
        %vm236 = vmand %vm234, %vm235
        %vm237 = vmor %vm233, %vm236
        %v238 = vsel %vm237, 1, 0
        %v239 = vand.u32 %v238, 65535
        %v240 = vshrl.u32 %v238, 16
        %v241 = vcvt.s32.f32 %v239
        %v242 = vcvt.s32.f32 %v240
        %243 = vadd.xlane.f32.xlu0 %v241
        %v244 = vpop.xlane.xlu0 %243
        %245 = vadd.xlane.f32.xlu0 %v242
        %v246 = vpop.xlane.xlu0 %245
        %v247 = vcvt.f32.s32 %v244
        %v248 = vcvt.f32.s32 %v246
        %v249 = vshll.u32 %v248, 16
        %v250 = vadd.s32 %v249, %v247
        %s251 = smul.u32 %s18, 5
        %s252 = sadd.s32 %s251, %s19
        %s253 = smul.u32 %s252, 8
        %v254 = vlaneseq
        %v255 = vshrl.u32 %v254, 7
        %v256 = vstv %s253
        %v257 = vadd.s32 %v255, %v256
        %vm258 = vcmp.lt.s32.totalorder %v257, 37
        %vm259 = vcmp.ge.s32.totalorder %v223, 0
        %vm260 = vmand %vm258, %vm259
        %vm261 = vcmp.lt.s32.totalorder %v223, 128
        %vm262 = vmand %vm260, %vm261
        %vm263 = vcmp.lt.s32.totalorder %v250, 1
        %vm264 = vmand %vm262, %vm263
        %v265 = vsel %vm264, 1, 0
        %v266 = vld [vmem:[#allocation2] sm:$0xff]
        %vm267 = vcmask 7168
        %v268 = vsel %vm267, %v265, 0
        %v269 = vand.u32 %v268, 65535
        %v270 = vshrl.u32 %v268, 16
        %v271 = vcvt.s32.f32 %v269
        %v272 = vcvt.s32.f32 %v270
        %273 = vadd.xlane.f32.xlu0 %v271
        %v274 = vpop.xlane.xlu0 %273
        %275 = vadd.xlane.f32.xlu0 %v272
        %v276 = vpop.xlane.xlu0 %275
        %v277 = vcvt.f32.s32 %v274
        %v278 = vcvt.f32.s32 %v276
        %v279 = vshll.u32 %v278, 16
        %v280 = vadd.s32 %v279, %v277
        %v281 = vrot.slane %v280, 4
        %v282 = vadd.s32 %v280, %v281
        %v283 = vrot.slane %v282, 2
        %v284 = vadd.s32 %v282, %v283
        %v285 = vrot.slane %v284, 1
        %v286 = vadd.s32 %v284, %v285
        %s287 = vtos %v286
        %v288 = vstv %s287
        %v289 = vadd.s32 %v266, %v288
        %290 = vst [vmem:[#allocation2] sm:$0xff] %v289
        // Predicated region
        $region33: #{tpu_custom_call.1} parent=27 // pred_check
          %p291 = pneg %p112
        $region34: #{tpu_custom_call.1} parent=27 // pred_check_branch
          %293 = sbr.rel (%p291) target = $region36
        $region35: #{tpu_custom_call.1} parent=27 // pred_region
          %295 = vsyncadd [#allocation3], 0
          %s296 = smul.addr %s18, 8
          %s297 = scalar_lea.hbm %s2, %s296
          %s299 = sshll.u32 [#allocation2], 4
          %s300 = int_to_ptr.vmem [resolvable:$true] %s299
          %s301 = sshll.u32 %s297, 4
          %s302 = int_to_ptr.hbm [resolvable:$true] %s301
          %304 = dma.vmem_to_hbm [thread:$0]  %s300, 128, %s302, [#allocation3]
        $region36: #{tpu_custom_call.1} parent=27 // pred_fallthru
          _
        // Predicated region
        $region37: #{tpu_custom_call.1} parent=27 // pred_check
          %p305 = pneg %p112
        $region38: #{tpu_custom_call.1} parent=27 // pred_check_branch
          %307 = sbr.rel (%p305) target = $region40
        $region39: #{tpu_custom_call.1} parent=27 // pred_region
          %309 = dma.done [#allocation3], 128
        $region40: #{tpu_custom_call.1} parent=27 // pred_fallthru
          _
      $region28: #{tpu_custom_call.1} parent=5 // pred_fallthru
        _
      %p310 = scmp.le.s32.totalorder 2, %s9
      // Predicated region
      $region41: #{tpu_custom_call.1} parent=5 // pred_check
        %p311 = pneg %p310
      $region42: #{tpu_custom_call.1} parent=5 // pred_check_branch
        %313 = sbr.rel (%p311) target = $region44
      $region43: #{tpu_custom_call.1} parent=5 // pred_region
        %s314 = ssub.s32 %s9, 2
      $region44: #{tpu_custom_call.1} parent=5 // pred_fallthru
        _
    $region6: #{tpu_custom_call.1} parent=1 // loop_footer
      %s13 = sadd.s32 1, %s9
    $region7: #{tpu_custom_call.1} parent=1 // loop_footer_branch
      %8 = sbr.rel target = $region3
    $region8: #{tpu_custom_call.1} parent=1 // loop_exit
      _
    %315 = vsyncpa [#allocation3], 1
    %s316 = scalar_lea.sflag [#allocation3], 1
    %317 = vsyncpa %s316, 1

</llo_original>
